<compile_context>
chip_gen: v5e
topology: v5e:2x2
jax: 0.10.0
libtpu: 0.0.40
codegen_flags: <defaults>
</compile_context>

<pallas_src>
import functools
import math

import jax
import jax.numpy as jnp
from jax import lax
from jax.experimental import pallas as pl
from jax.experimental.pallas import tpu as pltpu


LN_EPS = 1e-5  # torch.nn.LayerNorm default


def _round_up(n, m):
    return (n + m - 1) // m * m


def mlp_block_kernel(x_ref, gamma_ref, beta_ref, w1_ref, b1_ref, w2_ref, b2_ref,
                     o_ref, xn_ref, acc_ref, *, d_real):
    """Grid = (row tiles, hidden tiles).  Hidden axis is the reduction axis (last)."""
    k = pl.program_id(1)

    # ---- h-step 0: LayerNorm of the row tile into the (bf16) xn scratch ----
    @pl.when(k == 0)
    def _():
        x = x_ref[...].astype(jnp.float32)          # (tm, Dp); padded lanes/rows are 0
        d_pad = x.shape[-1]
        inv_d = 1.0 / d_real
        mean = jnp.sum(x, axis=-1, keepdims=True) * inv_d
        centered = x - mean
        if d_pad != d_real:
            # Mask padded lanes so they don't pollute the variance.
            lane = lax.broadcasted_iota(jnp.int32, (1, d_pad), 1)
            centered = jnp.where(lane < d_real, centered, 0.0)
        var = jnp.sum(centered * centered, axis=-1, keepdims=True) * inv_d
        xn = centered * lax.rsqrt(var + LN_EPS)
        xn = xn * gamma_ref[...] + beta_ref[...]     # gamma/beta padded with 0 -> xn pad = 0
        xn_ref[...] = xn.astype(xn_ref.dtype)

    # ---- per hidden chunk: Linear(D -> th) + exact GELU + partial Linear(th -> D) ----
    # w1_ref block is (1, Dp, th) (pre-blocked contiguous slab); w2_ref is (th, Dp).
    h = jnp.dot(xn_ref[...], w1_ref[0], preferred_element_type=jnp.float32)   # (tm, th)
    h = h + b1_ref[...]
    # Exact erf GELU (nn.GELU default).  Elementwise math stays f32.
    h = 0.5 * h * (1.0 + lax.erf(h * (1.0 / math.sqrt(2.0))))
    # Dropout (p) is identity in eval mode -> no-op.
    contrib = jnp.dot(h.astype(w2_ref.dtype), w2_ref[...],
                      preferred_element_type=jnp.float32)                      # (tm, Dp)

    @pl.when(k == 0)
    def _():
        acc_ref[...] = contrib            # write, no zero-init + add on first step

    @pl.when(k > 0)
    def _():
        acc_ref[...] += contrib

    # ---- last h-step: bias2 + residual + cast/store ----
    @pl.when(k == pl.num_programs(1) - 1)
    def _():
        y = acc_ref[...] + b2_ref[...] + x_ref[...].astype(jnp.float32)
        o_ref[...] = y.astype(o_ref.dtype)


def mlp_block(x, gamma, beta, w1, b1, w2, b2, *,
              tile_rows=512, tile_hidden=512, matmul_dtype=jnp.bfloat16):
    """x: (B, S, D).  w1: (D, H), w2: (H, D) (PyTorch weights transposed).

    Returns (B, S, D): residual + Dropout(Linear(Dropout(GELU(Linear(LN(x)))))),
    with dropout in inference mode.  matmul_dtype=bf16 runs the fast MXU path
    (f32 accumulation); pass jnp.float32 for bit-accurate reference semantics.
    """
    B, S, D = x.shape
    H = w1.shape[1]
    N = B * S

    # ---- lane-dense padding: last dims padded with zeros to multiples of 128 ----
    Dp = _round_up(D, 128)
    Hp128 = _round_up(H, 128)
    th = min(tile_hidden, Hp128)
    Hp = _round_up(H, th)                 # pad H UP to a multiple of th (zero columns)
    nK = Hp // th

    # ---- row tile selection: large tiles, but >=2 row tiles when N is small (megacore) ----
    N8 = _round_up(N, 8)
    if N8 >= 2 * tile_rows:
        tm = tile_rows
    elif N8 >= 16:
        tm = max(8, _round_up(N8 // 2, 8))
    else:
        tm = N8
    Np = _round_up(N8, tm)                # zero-pad rows -> no garbage tail, unmasked stores

    # ---- build padded / pre-blocked operands ----
    x2 = x.reshape(N, D)
    x2 = jnp.pad(x2, ((0, Np - N), (0, Dp - D)))
    gamma2 = jnp.pad(gamma, (0, Dp - D)).reshape(1, Dp).astype(jnp.float32)
    beta2 = jnp.pad(beta, (0, Dp - D)).reshape(1, Dp).astype(jnp.float32)
    b1p = jnp.pad(b1, (0, Hp - H)).reshape(1, Hp).astype(jnp.float32)
    b2p = jnp.pad(b2, (0, Dp - D)).reshape(1, Dp).astype(jnp.float32)
    # Weights: pad, cast to the MXU dtype in the wrapper (halves weight HBM traffic
    # for bf16), and pre-block W1 so each k-step DMA is a single contiguous slab.
    w1p = jnp.pad(w1, ((0, Dp - D), (0, Hp - H))).astype(matmul_dtype)
    w1b = w1p.reshape(Dp, nK, th).transpose(1, 0, 2)          # (nK, Dp, th)
    w2p = jnp.pad(w2, ((0, Hp - H), (0, Dp - D))).astype(matmul_dtype)

    grid = (Np // tm, nK)

    # ---- explicit VMEM budget (double-buffered tiles + scratch + h temp) ----
    itm = x.dtype.itemsize
    w_it = jnp.dtype(matmul_dtype).itemsize
    est = (2 * tm * Dp * itm            # x tile (double-buffered)
           + 2 * tm * Dp * itm          # out tile
           + 2 * Dp * th * w_it         # W1 block
           + 2 * th * Dp * w_it         # W2 block
           + 2 * 8 * th * 4             # b1 chunk (1-row blocks pad to 8 sublanes)
           + 2 * 3 * 8 * Dp * 4         # gamma, beta, b2
           + tm * Dp * w_it             # xn scratch
           + tm * Dp * 4                # f32 accumulator
           + tm * th * 4)               # h intermediate
    try:
        vmem_cap = pltpu.get_tpu_info().vmem_capacity_bytes
    except Exception:
        vmem_cap = 64 * 1024 * 1024     # conservative (v7x per-TC)
    vmem_limit = int(min(max(32 * 1024 * 1024, int(est * 1.5)),
                         int(vmem_cap * 0.85)))

    kernel = functools.partial(mlp_block_kernel, d_real=D)

    out2 = pl.pallas_call(
        kernel,
        out_shape=jax.ShapeDtypeStruct((Np, Dp), x.dtype),
        grid_spec=pltpu.PrefetchScalarGridSpec(
            num_scalar_prefetch=0,
            grid=grid,
            in_specs=[
                pl.BlockSpec((tm, Dp), lambda i, k: (i, 0)),       # x rows (resident over k)
                pl.BlockSpec((1, Dp), lambda i, k: (0, 0)),        # gamma
                pl.BlockSpec((1, Dp), lambda i, k: (0, 0)),        # beta
                pl.BlockSpec((1, Dp, th), lambda i, k: (k, 0, 0)),  # W1 k-slab (contiguous)
                pl.BlockSpec((1, th), lambda i, k: (0, k)),        # b1 chunk
                pl.BlockSpec((th, Dp), lambda i, k: (k, 0)),       # W2 row block
                pl.BlockSpec((1, Dp), lambda i, k: (0, 0)),        # b2
            ],
            out_specs=pl.BlockSpec((tm, Dp), lambda i, k: (i, 0)),
            scratch_shapes=[
                pltpu.VMEM((tm, Dp), matmul_dtype),   # xn (LayerNorm output, MXU input dtype)
                pltpu.VMEM((tm, Dp), jnp.float32),    # f32 accumulator
            ],
        ),
        compiler_params=pltpu.CompilerParams(
            dimension_semantics=("parallel", "arbitrary"),
            vmem_limit_bytes=vmem_limit,
        ),
    )(x2, gamma2, beta2, w1b, b1p, w2p, b2p)

    return out2[:N, :D].reshape(B, S, D)


def reference_mlp_block(x, gamma, beta, w1, b1, w2, b2):
    """Pure-JAX reference for correctness checking."""
    mean = jnp.mean(x, axis=-1, keepdims=True)
    var = jnp.mean((x - mean) ** 2, axis=-1, keepdims=True)
    xn = (x - mean) / jnp.sqrt(var + LN_EPS) * gamma + beta
    h = xn @ w1 + b1
    h = 0.5 * h * (1.0 + lax.erf(h / jnp.sqrt(2.0)))
    y = h @ w2 + b2
    return y + x


if __name__ == "__main__":
    # Small shapes consistent with the module's forward:
    # batch=2, seq=8, latent_vector_size=32, n_hidden=64, dropout=0.1 (eval -> identity).
    B, S, D, H = 2, 8, 32, 64

    key = jax.random.PRNGKey(0)
    kx, kw1, kb1, kw2, kb2 = jax.random.split(key, 5)

    x = jax.random.normal(kx, (B, S, D), dtype=jnp.float32)

    # Deterministic parameter init (torch.nn.Linear-style uniform bounds).
    gamma = jnp.ones((D,), dtype=jnp.float32)        # LayerNorm weight
    beta = jnp.zeros((D,), dtype=jnp.float32)        # LayerNorm bias
    lim1 = 1.0 / math.sqrt(D)
    w1 = jax.random.uniform(kw1, (D, H), jnp.float32, -lim1, lim1)
    b1 = jax.random.uniform(kb1, (H,), jnp.float32, -lim1, lim1)
    lim2 = 1.0 / math.sqrt(H)
    w2 = jax.random.uniform(kw2, (H, D), jnp.float32, -lim2, lim2)
    b2 = jax.random.uniform(kb2, (D,), jnp.float32, -lim2, lim2)

    ref = reference_mlp_block(x, gamma, beta, w1, b1, w2, b2)

    # f32 MXU path: bit-comparable to the PyTorch/JAX reference.
    out_f32 = mlp_block(x, gamma, beta, w1, b1, w2, b2, matmul_dtype=jnp.float32)
    out_f32 = jax.block_until_ready(out_f32)
    assert out_f32.shape == (B, S, D)
    assert jnp.allclose(out_f32, ref, atol=1e-5, rtol=1e-5), (
        f"f32 path: max abs err = {jnp.max(jnp.abs(out_f32 - ref))}")

    # Default (bf16 MXU, f32 accumulation) fast path: looser tolerance by design.
    out_bf16 = mlp_block(x, gamma, beta, w1, b1, w2, b2)
    out_bf16 = jax.block_until_ready(out_bf16)
    assert out_bf16.shape == (B, S, D)
    assert jnp.allclose(out_bf16, ref, atol=5e-2, rtol=5e-2), (
        f"bf16 path: max abs err = {jnp.max(jnp.abs(out_bf16 - ref))}")

    # TODO(synk): dropout is implemented as identity (inference mode); training-mode
    # dropout would need pltpu.prng_seed/prng_random_bits masking inside the kernel.
    print("KERNEL_OK")
</pallas_src>

<mosaic_0001>
module attributes {stable_mosaic.version = 11 : i64} {
  func.func @mlp_block_kernel(%arg0: i32, %arg1: i32, %arg2: memref<8x128xf32, #tpu.memory_space<vmem>>, %arg3: memref<1x128xf32, #tpu.memory_space<vmem>>, %arg4: memref<1x128xf32, #tpu.memory_space<vmem>>, %arg5: memref<1x128x128xf32, #tpu.memory_space<vmem>>, %arg6: memref<1x128xf32, #tpu.memory_space<vmem>>, %arg7: memref<128x128xf32, #tpu.memory_space<vmem>>, %arg8: memref<1x128xf32, #tpu.memory_space<vmem>>, %arg9: memref<8x128xf32, #tpu.memory_space<vmem>>, %arg10: memref<8x128xf32, #tpu.memory_space<vmem>>, %arg11: memref<8x128xf32, #tpu.memory_space<vmem>>) attributes {dimension_semantics = [#tpu.dimension_semantics<parallel>, #tpu.dimension_semantics<arbitrary>], iteration_bounds = array<i64: 2, 1>, scalar_prefetch = 0 : i64, scratch_operands = 2 : i64, tpu.core_type = #tpu.core_type<tc>, window_params = [{transform_indices = @transform_0, window_bounds = array<i64: 8, 128>}, {pipeline_mode = #tpu.pipeline_mode<synchronous>, transform_indices = @transform_1, window_bounds = array<i64: 1, 128>}, {pipeline_mode = #tpu.pipeline_mode<synchronous>, transform_indices = @transform_2, window_bounds = array<i64: 1, 128>}, {transform_indices = @transform_3, window_bounds = array<i64: 1, 128, 128>}, {transform_indices = @transform_4, window_bounds = array<i64: 1, 128>}, {transform_indices = @transform_5, window_bounds = array<i64: 128, 128>}, {pipeline_mode = #tpu.pipeline_mode<synchronous>, transform_indices = @transform_6, window_bounds = array<i64: 1, 128>}, {transform_indices = @transform_7, window_bounds = array<i64: 8, 128>}]} {
    %c0_i32 = arith.constant 0 : i32
    %0 = arith.cmpi eq, %arg1, %c0_i32 : i32
    %1 = arith.extui %0 : i1 to i32
    %c0_i32_0 = arith.constant 0 : i32
    %2 = arith.cmpi ne, %1, %c0_i32_0 : i32
    scf.if %2 {
      %c0_19 = arith.constant 0 : index
      %c0_20 = arith.constant 0 : index
      %29 = vector.load %arg2[%c0_19, %c0_20] : memref<8x128xf32, #tpu.memory_space<vmem>>, vector<8x128xf32>
      %cst_21 = arith.constant dense<0.000000e+00> : vector<8xf32>
      %30 = vector.multi_reduction <add>, %29, %cst_21 [1] : vector<8x128xf32> to vector<8xf32>
      %31 = vector.shape_cast %30 : vector<8xf32> to vector<8x1xf32>
      %cst_22 = arith.constant 3.125000e-02 : f32
      %32 = vector.broadcast %cst_22 : f32 to vector<8x1xf32>
      %33 = arith.mulf %31, %32 : vector<8x1xf32>
      %34 = vector.broadcast %33 : vector<8x1xf32> to vector<8x128xf32>
      %35 = arith.subf %29, %34 : vector<8x128xf32>
      %36 = tpu.iota {dimensions = array<i32: 1>} : vector<1x128xi32>
      %c32_i32 = arith.constant 32 : i32
      %37 = vector.broadcast %c32_i32 : i32 to vector<1x128xi32>
      %38 = arith.cmpi slt, %36, %37 : vector<1x128xi32>
      %cst_23 = arith.constant 0.000000e+00 : f32
      %39 = vector.shape_cast %38 : vector<1x128xi1> to vector<1x128xi1>
      %40 = vector.broadcast %39 : vector<1x128xi1> to vector<8x128xi1>
      %41 = vector.broadcast %cst_23 : f32 to vector<8x128xf32>
      %42 = arith.select %40, %35, %41 : vector<8x128xi1>, vector<8x128xf32>
      %43 = arith.mulf %42, %42 : vector<8x128xf32>
      %cst_24 = arith.constant dense<0.000000e+00> : vector<8xf32>
      %44 = vector.multi_reduction <add>, %43, %cst_24 [1] : vector<8x128xf32> to vector<8xf32>
      %45 = vector.shape_cast %44 : vector<8xf32> to vector<8x1xf32>
      %cst_25 = arith.constant 3.125000e-02 : f32
      %46 = vector.broadcast %cst_25 : f32 to vector<8x1xf32>
      %47 = arith.mulf %45, %46 : vector<8x1xf32>
      %cst_26 = arith.constant 9.99999974E-6 : f32
      %48 = vector.broadcast %cst_26 : f32 to vector<8x1xf32>
      %49 = arith.addf %47, %48 : vector<8x1xf32>
      %50 = math.rsqrt %49 : vector<8x1xf32>
      %51 = vector.broadcast %50 : vector<8x1xf32> to vector<8x128xf32>
      %52 = arith.mulf %42, %51 : vector<8x128xf32>
      %c0_27 = arith.constant 0 : index
      %c0_28 = arith.constant 0 : index
      %53 = vector.load %arg3[%c0_27, %c0_28] : memref<1x128xf32, #tpu.memory_space<vmem>>, vector<1x128xf32>
      %54 = vector.broadcast %53 : vector<1x128xf32> to vector<8x128xf32>
      %55 = arith.mulf %52, %54 : vector<8x128xf32>
      %c0_29 = arith.constant 0 : index
      %c0_30 = arith.constant 0 : index
      %56 = vector.load %arg4[%c0_29, %c0_30] : memref<1x128xf32, #tpu.memory_space<vmem>>, vector<1x128xf32>
      %57 = vector.broadcast %56 : vector<1x128xf32> to vector<8x128xf32>
      %58 = arith.addf %55, %57 : vector<8x128xf32>
      %c0_31 = arith.constant 0 : index
      %c0_32 = arith.constant 0 : index
      %59 = vector.load %arg10[%c0_31, %c0_32] : memref<8x128xf32, #tpu.memory_space<vmem>>, vector<8x128xf32>
      tpu.vector_store %arg10[%c0_31, %c0_32], %58 {strides = array<i32>} : memref<8x128xf32, #tpu.memory_space<vmem>>, vector<8x128xf32>,
    } else {
    }
    %c0 = arith.constant 0 : index
    %c0_1 = arith.constant 0 : index
    %3 = vector.load %arg10[%c0, %c0_1] : memref<8x128xf32, #tpu.memory_space<vmem>>, vector<8x128xf32>
    %c0_2 = arith.constant 0 : index
    %c0_3 = arith.constant 0 : index
    %c0_4 = arith.constant 0 : index
    %4 = vector.load %arg5[%c0_2, %c0_3, %c0_4] : memref<1x128x128xf32, #tpu.memory_space<vmem>>, vector<1x128x128xf32>
    %5 = vector.shape_cast %4 : vector<1x128x128xf32> to vector<128x128xf32>
    %cst = arith.constant dense<0.000000e+00> : vector<8x128xf32>
    %6 = tpu.matmul %3, %5, %cst {dimension_numbers = #tpu.dot_dimension_numbers<[1], [0], [0], [1], [0, 0, 1, 1], [], []>} : vector<8x128xf32>, vector<128x128xf32>, vector<8x128xf32> -> vector<8x128xf32>
    %c0_5 = arith.constant 0 : index
    %c0_6 = arith.constant 0 : index
    %7 = vector.load %arg6[%c0_5, %c0_6] : memref<1x128xf32, #tpu.memory_space<vmem>>, vector<1x128xf32>
    %8 = vector.broadcast %7 : vector<1x128xf32> to vector<8x128xf32>
    %9 = arith.addf %6, %8 : vector<8x128xf32>
    %cst_7 = arith.constant 5.000000e-01 : f32
    %10 = vector.broadcast %cst_7 : f32 to vector<8x128xf32>
    %11 = arith.mulf %10, %9 : vector<8x128xf32>
    %cst_8 = arith.constant 0.707106769 : f32
    %12 = vector.broadcast %cst_8 : f32 to vector<8x128xf32>
    %13 = arith.mulf %9, %12 : vector<8x128xf32>
    %14 = math.erf %13 : vector<8x128xf32>
    %cst_9 = arith.constant 1.000000e+00 : f32
    %15 = vector.broadcast %cst_9 : f32 to vector<8x128xf32>
    %16 = arith.addf %15, %14 : vector<8x128xf32>
    %17 = arith.mulf %11, %16 : vector<8x128xf32>
    %c0_10 = arith.constant 0 : index
    %c0_11 = arith.constant 0 : index
    %18 = vector.load %arg7[%c0_10, %c0_11] : memref<128x128xf32, #tpu.memory_space<vmem>>, vector<128x128xf32>
    %cst_12 = arith.constant dense<0.000000e+00> : vector<8x128xf32>
    %19 = tpu.matmul %17, %18, %cst_12 {dimension_numbers = #tpu.dot_dimension_numbers<[1], [0], [0], [1], [0, 0, 1, 1], [], []>} : vector<8x128xf32>, vector<128x128xf32>, vector<8x128xf32> -> vector<8x128xf32>
    %c0_i32_13 = arith.constant 0 : i32
    %20 = arith.cmpi eq, %arg1, %c0_i32_13 : i32
    %21 = arith.extui %20 : i1 to i32
    %c0_i32_14 = arith.constant 0 : i32
    %22 = arith.cmpi ne, %21, %c0_i32_14 : i32
    scf.if %22 {
      %c0_19 = arith.constant 0 : index
      %c0_20 = arith.constant 0 : index
      %29 = vector.load %arg11[%c0_19, %c0_20] : memref<8x128xf32, #tpu.memory_space<vmem>>, vector<8x128xf32>
      tpu.vector_store %arg11[%c0_19, %c0_20], %19 {strides = array<i32>} : memref<8x128xf32, #tpu.memory_space<vmem>>, vector<8x128xf32>,
    } else {
    }
    %c0_i32_15 = arith.constant 0 : i32
    %23 = arith.cmpi sgt, %arg1, %c0_i32_15 : i32
    %24 = arith.extui %23 : i1 to i32
    %c0_i32_16 = arith.constant 0 : i32
    %25 = arith.cmpi ne, %24, %c0_i32_16 : i32
    scf.if %25 {
      %c0_19 = arith.constant 0 : index
      %c0_20 = arith.constant 0 : index
      %29 = vector.load %arg11[%c0_19, %c0_20] : memref<8x128xf32, #tpu.memory_space<vmem>>, vector<8x128xf32>
      %30 = arith.addf %29, %19 : vector<8x128xf32>
      %c0_21 = arith.constant 0 : index
      %c0_22 = arith.constant 0 : index
      %31 = vector.load %arg11[%c0_21, %c0_22] : memref<8x128xf32, #tpu.memory_space<vmem>>, vector<8x128xf32>
      tpu.vector_store %arg11[%c0_21, %c0_22], %30 {strides = array<i32>} : memref<8x128xf32, #tpu.memory_space<vmem>>, vector<8x128xf32>,
    } else {
    }
    %c0_i32_17 = arith.constant 0 : i32
    %26 = arith.cmpi eq, %arg1, %c0_i32_17 : i32
    %27 = arith.extui %26 : i1 to i32
    %c0_i32_18 = arith.constant 0 : i32
    %28 = arith.cmpi ne, %27, %c0_i32_18 : i32
    scf.if %28 {
      %c0_19 = arith.constant 0 : index
      %c0_20 = arith.constant 0 : index
      %29 = vector.load %arg11[%c0_19, %c0_20] : memref<8x128xf32, #tpu.memory_space<vmem>>, vector<8x128xf32>
      %c0_21 = arith.constant 0 : index
      %c0_22 = arith.constant 0 : index
      %30 = vector.load %arg8[%c0_21, %c0_22] : memref<1x128xf32, #tpu.memory_space<vmem>>, vector<1x128xf32>
      %31 = vector.broadcast %30 : vector<1x128xf32> to vector<8x128xf32>
      %32 = arith.addf %29, %31 : vector<8x128xf32>
      %c0_23 = arith.constant 0 : index
      %c0_24 = arith.constant 0 : index
      %33 = vector.load %arg2[%c0_23, %c0_24] : memref<8x128xf32, #tpu.memory_space<vmem>>, vector<8x128xf32>
      %34 = arith.addf %32, %33 : vector<8x128xf32>
      %c0_25 = arith.constant 0 : index
      %c0_26 = arith.constant 0 : index
      %35 = vector.load %arg9[%c0_25, %c0_26] : memref<8x128xf32, #tpu.memory_space<vmem>>, vector<8x128xf32>
      tpu.vector_store %arg9[%c0_25, %c0_26], %34 {strides = array<i32>} : memref<8x128xf32, #tpu.memory_space<vmem>>, vector<8x128xf32>,
    } else {
    }
    return
  }
  func.func @transform_0(%arg0: i32, %arg1: i32) -> (i32, i32) {
    %c0_i32 = arith.constant 0 : i32
    %c0_i32_0 = arith.constant 0 : i32
    return %arg0, %c0_i32 : i32, i32
  }
  func.func @transform_1(%arg0: i32, %arg1: i32) -> (i32, i32) {
    %c0_i32 = arith.constant 0 : i32
    %c0_i32_0 = arith.constant 0 : i32
    %c0_i32_1 = arith.constant 0 : i32
    return %c0_i32, %c0_i32_0 : i32, i32
  }
  func.func @transform_2(%arg0: i32, %arg1: i32) -> (i32, i32) {
    %c0_i32 = arith.constant 0 : i32
    %c0_i32_0 = arith.constant 0 : i32
    %c0_i32_1 = arith.constant 0 : i32
    return %c0_i32, %c0_i32_0 : i32, i32
  }
  func.func @transform_3(%arg0: i32, %arg1: i32) -> (i32, i32, i32) {
    %c0_i32 = arith.constant 0 : i32
    %c0_i32_0 = arith.constant 0 : i32
    %c0_i32_1 = arith.constant 0 : i32
    return %arg1, %c0_i32, %c0_i32_0 : i32, i32, i32
  }
  func.func @transform_4(%arg0: i32, %arg1: i32) -> (i32, i32) {
    %c0_i32 = arith.constant 0 : i32
    %c0_i32_0 = arith.constant 0 : i32
    return %c0_i32, %arg1 : i32, i32
  }
  func.func @transform_5(%arg0: i32, %arg1: i32) -> (i32, i32) {
    %c0_i32 = arith.constant 0 : i32
    %c0_i32_0 = arith.constant 0 : i32
    return %arg1, %c0_i32 : i32, i32
  }
  func.func @transform_6(%arg0: i32, %arg1: i32) -> (i32, i32) {
    %c0_i32 = arith.constant 0 : i32
    %c0_i32_0 = arith.constant 0 : i32
    %c0_i32_1 = arith.constant 0 : i32
    return %c0_i32, %c0_i32_0 : i32, i32
  }
  func.func @transform_7(%arg0: i32, %arg1: i32) -> (i32, i32) {
    %c0_i32 = arith.constant 0 : i32
    %c0_i32_0 = arith.constant 0 : i32
    return %arg0, %c0_i32 : i32, i32
  }
}

</mosaic_0001>

<llo_original>
// kernel: tpu_custom_call.1
$region0: #{tpu_custom_call.1}
  #allocation0 [shape = 'u32[]', space=smem, size = 0x4, offset = 0x4, fixed_abs, tag = 'smem constant byte address 0x4 - core index']
  #allocation1 [shape = 'u32[72,128]{1,0:T(1,128)}', space=vmem, size = 0x9000, scoped, tag = 'internal scratch']
  #allocation2 [shape = 'f32[8,128]{1,0:T(8,128)}', space=vmem, size = 0x1000, scoped, tag = 'scratch operand']
  #allocation3 [shape = 'f32[8,128]{1,0:T(8,128)}', space=vmem, size = 0x1000, scoped, tag = 'scratch operand']
  %s0 = inlined_call_operand.hbm [shape: f32[16,128], index: 0, kind: input, shape index: {}]
  %s1 = inlined_call_operand.hbm [shape: f32[1,128], index: 1, kind: input, shape index: {}]
  %s2 = inlined_call_operand.vmem [shape: f32[1,128], index: 2, kind: input, shape index: {}]
  %s3 = inlined_call_operand.hbm [shape: f32[1,128,128], index: 3, kind: input, shape index: {}]
  %s4 = inlined_call_operand.vmem [shape: f32[1,128], index: 4, kind: input, shape index: {}]
  %s5 = inlined_call_operand.hbm [shape: f32[128,128], index: 5, kind: input, shape index: {}]
  %s6 = inlined_call_operand.vmem [shape: f32[1,128], index: 6, kind: input, shape index: {}]
  %s7 = inlined_call_operand.hbm [shape: f32[16,128], index: 7, kind: output, shape index: {}]
  %s8 = sld [smem:[#allocation0]]
  $region93: #{tpu_custom_call.1} parent=0
    _
  %s10 = ssub.s32 1, %s8
  %s11 = scalar_select 0, %s10, %s8
  $region1: #{tpu_custom_call.1} parent=0
    #allocation4 [shape = 'u8[8192]{0}', space=vmem, size = 0x2000, scoped, tag = 'input window, operand 0']
    #allocation5 [shape = 's32[2]{0}', space=sflag, size = 0x8, scoped, tag = 'scoped memory for tpu_custom_call.1']
    #allocation6 [shape = 's32[2]{0}', space=sflag, size = 0x8, scoped, tag = 'scoped memory for tpu_custom_call.1']
    #allocation7 [shape = 'u8[512]{0}', space=vmem, size = 0x400, scoped, tag = 'input window, operand 1, single buffered']
    #allocation8 [shape = 's32[1]{0}', space=sflag, size = 0x4, scoped, tag = 'scoped memory for tpu_custom_call.1']
    #allocation9 [shape = 'u8[65536]{0}', space=vmem, size = 0x10000, scoped, tag = 'input window, operand 3, single buffered']
    #allocation10 [shape = 'u8[65536]{0}', space=vmem, size = 0x10000, scoped, tag = 'input window, operand 5, single buffered']
    #allocation11 [shape = 's32[1]{0}', space=sflag, size = 0x4, scoped, tag = 'scoped memory for tpu_custom_call.1']
    #allocation12 [shape = 'u8[8192]{0}', space=vmem, size = 0x2000, scoped, tag = 'output window, operand 0']
    %12 = vsyncpa [#allocation5], 0
    %s13 = scalar_lea.sflag [#allocation5], 1
    %14 = vsyncpa %s13, 0
    %15 = vsyncpa [#allocation8], 0
    %16 = vsyncpa [#allocation11], 0
    %17 = vsyncpa [#allocation6], 0
    %s18 = scalar_lea.sflag [#allocation6], 1
    %19 = vsyncpa %s18, 0
    loop: start=0, step=1, limit=4
    $region2: #{tpu_custom_call.1} parent=1 // loop_pre_header
      _
    $region3: #{tpu_custom_call.1} parent=1 // loop_header
      %s21 = sphi 0, %s25
      %p22 = scmp.ge.s32.totalorder %s21, 4
      %s28 = sphi 0, %s40
      %s29 = sphi 0, %s36
      %s30 = sphi 0, %s28
      %s31 = sphi 0, %s29
      %s32 = sphi 0, %s30
      %s33 = sphi 0, %s31
      %s43 = sphi 0, %s45
      %s46 = sphi 0, %s43
      %s47 = sphi 0, %s46
      %s63 = sphi 0, %s47
      %s67 = sphi 0, %s67
      %s69 = sphi 0, %s67
      %s70 = sphi 0, %s69
      %s84 = sphi 0, %s70
      %s88 = sphi 0, %s88
      %s90 = sphi 0, %s88
      %s91 = sphi 0, %s90
      %s105 = sphi 0, %s91
      %s111 = sphi 0, %s113
      %s114 = sphi 0, %s111
      %s115 = sphi 0, %s114
      %s131 = sphi 0, %s115
      %s137 = sphi 0, %s139
      %s140 = sphi 0, %s137
      %s141 = sphi 0, %s140
      %s157 = sphi 0, %s141
      %s163 = sphi 0, %s165
      %s166 = sphi 0, %s163
      %s167 = sphi 0, %s166
      %s183 = sphi 0, %s167
      %s187 = sphi 0, %s187
      %s189 = sphi 0, %s187
      %s190 = sphi 0, %s189
      %s204 = sphi 0, %s190
      %s210 = sphi 0, %s212
      %s213 = sphi 0, %s210
      %s214 = sphi 0, %s213
      %s230 = sphi 0, %s214
    $region4: #{tpu_custom_call.1} parent=1 // loop_header_branch
      %24 = sbr.rel (%p22) target = $region8
    $region5: #{tpu_custom_call.1} parent=1 // loop_body
      %s26 = ssub.s32 %s21, 1
      %s27 = ssub.s32 %s21, 2
      %s34 = sadd.s32 1, %s29
      %p35 = scmp.ge.s32.totalorder %s34, 1
      %s36 = scalar_select %p35, 0, %s34
      %s37 = sadd.s32 1, %s28
      %s38 = scalar_select %p35, %s37, %s28
      %p39 = scmp.ge.s32.totalorder %s38, 2
      %s40 = scalar_select %p39, 0, %s38
      %s41 = ssub.s32 %s28, %s40
      %p42 = scmp.eq.s32.totalorder %s41, 0
      %s44 = sadd.s32 %s43, 1
      %s45 = scalar_select %p42, %s43, %s44
      %p48 = pneg %p42
      %p49 = scmp.eq.s32.totalorder %s21, 1
      %p50 = por %p48, %p49
      %p51 = scmp.ne.s32.totalorder %s43, %s46
      %p52 = scmp.eq.s32.totalorder %s21, 0
      %p53 = por %p51, %p52
      %p54 = scmp.ne.s32.totalorder %s43, %s46
      %p55 = scmp.eq.s32.totalorder %s26, 1
      %p56 = por %p54, %p55
      %p57 = scmp.ne.s32.totalorder %s46, %s47
      %p58 = scmp.eq.s32.totalorder %s26, 0
      %p59 = por %p57, %p58
      %p60 = scmp.ne.s32.totalorder %s46, %s47
      %p61 = scmp.eq.s32.totalorder %s27, 1
      %p62 = por %p60, %p61
      %p64 = scmp.ne.s32.totalorder %s47, %s63
      %p65 = scmp.eq.s32.totalorder %s27, 0
      %p66 = por %p64, %p65
      %s68 = sadd.s32 %s67, 1
      %p71 = scmp.eq.s32.totalorder %s21, 1
      %p72 = scmp.ne.s32.totalorder %s67, %s69
      %p73 = scmp.eq.s32.totalorder %s21, 0
      %p74 = por %p72, %p73
      %p75 = scmp.ne.s32.totalorder %s67, %s69
      %p76 = scmp.eq.s32.totalorder %s26, 1
      %p77 = por %p75, %p76
      %p78 = scmp.ne.s32.totalorder %s69, %s70
      %p79 = scmp.eq.s32.totalorder %s26, 0
      %p80 = por %p78, %p79
      %p81 = scmp.ne.s32.totalorder %s69, %s70
      %p82 = scmp.eq.s32.totalorder %s27, 1
      %p83 = por %p81, %p82
      %p85 = scmp.ne.s32.totalorder %s70, %s84
      %p86 = scmp.eq.s32.totalorder %s27, 0
      %p87 = por %p85, %p86
      %s89 = sadd.s32 %s88, 1
      %p92 = scmp.eq.s32.totalorder %s21, 1
      %p93 = scmp.ne.s32.totalorder %s88, %s90
      %p94 = scmp.eq.s32.totalorder %s21, 0
      %p95 = por %p93, %p94
      %p96 = scmp.ne.s32.totalorder %s88, %s90
      %p97 = scmp.eq.s32.totalorder %s26, 1
      %p98 = por %p96, %p97
      %p99 = scmp.ne.s32.totalorder %s90, %s91
      %p100 = scmp.eq.s32.totalorder %s26, 0
      %p101 = por %p99, %p100
      %p102 = scmp.ne.s32.totalorder %s90, %s91
      %p103 = scmp.eq.s32.totalorder %s27, 1
      %p104 = por %p102, %p103
      %p106 = scmp.ne.s32.totalorder %s91, %s105
      %p107 = scmp.eq.s32.totalorder %s27, 0
      %p108 = por %p106, %p107
      %s109 = ssub.s32 %s29, %s36
      %p110 = scmp.eq.s32.totalorder %s109, 0
      %s112 = sadd.s32 %s111, 1
      %s113 = scalar_select %p110, %s111, %s112
      %p116 = pneg %p110
      %p117 = scmp.eq.s32.totalorder %s21, 1
      %p118 = por %p116, %p117
      %p119 = scmp.ne.s32.totalorder %s111, %s114
      %p120 = scmp.eq.s32.totalorder %s21, 0
      %p121 = por %p119, %p120
      %p122 = scmp.ne.s32.totalorder %s111, %s114
      %p123 = scmp.eq.s32.totalorder %s26, 1
      %p124 = por %p122, %p123
      %p125 = scmp.ne.s32.totalorder %s114, %s115
      %p126 = scmp.eq.s32.totalorder %s26, 0
      %p127 = por %p125, %p126
      %p128 = scmp.ne.s32.totalorder %s114, %s115
      %p129 = scmp.eq.s32.totalorder %s27, 1
      %p130 = por %p128, %p129
      %p132 = scmp.ne.s32.totalorder %s115, %s131
      %p133 = scmp.eq.s32.totalorder %s27, 0
      %p134 = por %p132, %p133
      %s135 = ssub.s32 %s29, %s36
      %p136 = scmp.eq.s32.totalorder %s135, 0
      %s138 = sadd.s32 %s137, 1
      %s139 = scalar_select %p136, %s137, %s138
      %p142 = pneg %p136
      %p143 = scmp.eq.s32.totalorder %s21, 1
      %p144 = por %p142, %p143
      %p145 = scmp.ne.s32.totalorder %s137, %s140
      %p146 = scmp.eq.s32.totalorder %s21, 0
      %p147 = por %p145, %p146
      %p148 = scmp.ne.s32.totalorder %s137, %s140
      %p149 = scmp.eq.s32.totalorder %s26, 1
      %p150 = por %p148, %p149
      %p151 = scmp.ne.s32.totalorder %s140, %s141
      %p152 = scmp.eq.s32.totalorder %s26, 0
      %p153 = por %p151, %p152
      %p154 = scmp.ne.s32.totalorder %s140, %s141
      %p155 = scmp.eq.s32.totalorder %s27, 1
      %p156 = por %p154, %p155
      %p158 = scmp.ne.s32.totalorder %s141, %s157
      %p159 = scmp.eq.s32.totalorder %s27, 0
      %p160 = por %p158, %p159
      %s161 = ssub.s32 %s29, %s36
      %p162 = scmp.eq.s32.totalorder %s161, 0
      %s164 = sadd.s32 %s163, 1
      %s165 = scalar_select %p162, %s163, %s164
      %p168 = pneg %p162
      %p169 = scmp.eq.s32.totalorder %s21, 1
      %p170 = por %p168, %p169
      %p171 = scmp.ne.s32.totalorder %s163, %s166
      %p172 = scmp.eq.s32.totalorder %s21, 0
      %p173 = por %p171, %p172
      %p174 = scmp.ne.s32.totalorder %s163, %s166
      %p175 = scmp.eq.s32.totalorder %s26, 1
      %p176 = por %p174, %p175
      %p177 = scmp.ne.s32.totalorder %s166, %s167
      %p178 = scmp.eq.s32.totalorder %s26, 0
      %p179 = por %p177, %p178
      %p180 = scmp.ne.s32.totalorder %s166, %s167
      %p181 = scmp.eq.s32.totalorder %s27, 1
      %p182 = por %p180, %p181
      %p184 = scmp.ne.s32.totalorder %s167, %s183
      %p185 = scmp.eq.s32.totalorder %s27, 0
      %p186 = por %p184, %p185
      %s188 = sadd.s32 %s187, 1
      %p191 = scmp.eq.s32.totalorder %s21, 1
      %p192 = scmp.ne.s32.totalorder %s187, %s189
      %p193 = scmp.eq.s32.totalorder %s21, 0
      %p194 = por %p192, %p193
      %p195 = scmp.ne.s32.totalorder %s187, %s189
      %p196 = scmp.eq.s32.totalorder %s26, 1
      %p197 = por %p195, %p196
      %p198 = scmp.ne.s32.totalorder %s189, %s190
      %p199 = scmp.eq.s32.totalorder %s26, 0
      %p200 = por %p198, %p199
      %p201 = scmp.ne.s32.totalorder %s189, %s190
      %p202 = scmp.eq.s32.totalorder %s27, 1
      %p203 = por %p201, %p202
      %p205 = scmp.ne.s32.totalorder %s190, %s204
      %p206 = scmp.eq.s32.totalorder %s27, 0
      %p207 = por %p205, %p206
      %s208 = ssub.s32 %s28, %s40
      %p209 = scmp.eq.s32.totalorder %s208, 0
      %s211 = sadd.s32 %s210, 1
      %s212 = scalar_select %p209, %s210, %s211
      %p215 = pneg %p209
      %p216 = scmp.eq.s32.totalorder %s21, 1
      %p217 = por %p215, %p216
      %p218 = scmp.ne.s32.totalorder %s210, %s213
      %p219 = scmp.eq.s32.totalorder %s21, 0
      %p220 = por %p218, %p219
      %p221 = scmp.ne.s32.totalorder %s210, %s213
      %p222 = scmp.eq.s32.totalorder %s26, 1
      %p223 = por %p221, %p222
      %p224 = scmp.ne.s32.totalorder %s213, %s214
      %p225 = scmp.eq.s32.totalorder %s26, 0
      %p226 = por %p224, %p225
      %p227 = scmp.ne.s32.totalorder %s213, %s214
      %p228 = scmp.eq.s32.totalorder %s27, 1
      %p229 = por %p227, %p228
      %p231 = scmp.ne.s32.totalorder %s214, %s230
      %p232 = scmp.eq.s32.totalorder %s27, 0
      %p233 = por %p231, %p232
      %p234 = scmp.le.s32.totalorder 1, %s21
      %p235 = scmp.lt.s32.totalorder %s21, 3
      %p236 = pnand %p234, %p235
      %p237 = pneg %p236
      // Predicated region
      $region9: #{tpu_custom_call.1} parent=5 // pred_check
        _
      $region10: #{tpu_custom_call.1} parent=5 // pred_check_branch
        %239 = sbr.rel (%p236) target = $region12
      $region11: #{tpu_custom_call.1} parent=5 // pred_region
        %s240 = ssub.s32 %s21, 1
        // Predicated region
        $region13: #{tpu_custom_call.1} parent=11 // pred_check
          %p241 = pneg %p80
        $region14: #{tpu_custom_call.1} parent=11 // pred_check_branch
          %243 = sbr.rel (%p241) target = $region16
        $region15: #{tpu_custom_call.1} parent=11 // pred_region
          %245 = vsyncadd [#allocation8], 0
          %s247 = sshll.u32 %s1, 4
          %s248 = int_to_ptr.hbm [resolvable:$true] %s247
          %s249 = sshll.u32 [#allocation7], 4
          %s250 = int_to_ptr.vmem [resolvable:$true] %s249
          %252 = dma.hbm_to_vmem [thread:$0]  %s248, 16, %s250, [#allocation8]
        $region16: #{tpu_custom_call.1} parent=11 // pred_fallthru
          _
        // Predicated region
        $region17: #{tpu_custom_call.1} parent=11 // pred_check
          %p253 = pneg %p101
        $region18: #{tpu_custom_call.1} parent=11 // pred_check_branch
          %255 = sbr.rel (%p253) target = $region20
        $region19: #{tpu_custom_call.1} parent=11 // pred_region
          _
        $region20: #{tpu_custom_call.1} parent=11 // pred_fallthru
          _
        // Predicated region
        $region21: #{tpu_custom_call.1} parent=11 // pred_check
          %p256 = pneg %p127
        $region22: #{tpu_custom_call.1} parent=11 // pred_check_branch
          %258 = sbr.rel (%p256) target = $region24
        $region23: #{tpu_custom_call.1} parent=11 // pred_region
          %260 = vsyncadd [#allocation8], 0
          %s261 = smul.addr %s31, 16
          %s262 = smul.addr %s261, 8
          %s263 = scalar_lea.hbm %s3, %s262
          %s264 = sshll.u32 %s263, 4
          %s265 = int_to_ptr.hbm [resolvable:$true] %s264
          %s266 = sshll.u32 [#allocation9], 4
          %s267 = int_to_ptr.vmem [resolvable:$true] %s266
          %272 = dma.hbm_to_vmem [thread:$0]  %s265, 2048, %s267, [#allocation8], 128, 128, 8
        $region24: #{tpu_custom_call.1} parent=11 // pred_fallthru
          _
        // Predicated region
        $region25: #{tpu_custom_call.1} parent=11 // pred_check
          %p273 = pneg %p153
        $region26: #{tpu_custom_call.1} parent=11 // pred_check_branch
          %275 = sbr.rel (%p273) target = $region28
        $region27: #{tpu_custom_call.1} parent=11 // pred_region
          %p276 = scmp.lt.s32.totalorder %s31, 0
          %s277 = scalar_select %p276, %s31, 0
          %s278 = scalar_lea.vmem %s4, %s277
        $region28: #{tpu_custom_call.1} parent=11 // pred_fallthru
          _
        // Predicated region
        $region29: #{tpu_custom_call.1} parent=11 // pred_check
          %p279 = pneg %p179
        $region30: #{tpu_custom_call.1} parent=11 // pred_check_branch
          %281 = sbr.rel (%p279) target = $region32
        $region31: #{tpu_custom_call.1} parent=11 // pred_region
          %s282 = smul.u32 16, %s31
          %284 = vsyncadd [#allocation11], 0
          %s285 = smul.addr %s282, 8
          %s286 = scalar_lea.hbm %s5, %s285
          %s287 = sshll.u32 %s286, 4
          %s288 = int_to_ptr.hbm [resolvable:$true] %s287
          %s289 = sshll.u32 [#allocation10], 4
          %s290 = int_to_ptr.vmem [resolvable:$true] %s289
          %295 = dma.hbm_to_vmem [thread:$0]  %s288, 2048, %s290, [#allocation11], 128, 128, 8
        $region32: #{tpu_custom_call.1} parent=11 // pred_fallthru
          _
        // Predicated region
        $region33: #{tpu_custom_call.1} parent=11 // pred_check
          %p296 = pneg %p200
        $region34: #{tpu_custom_call.1} parent=11 // pred_check_branch
          %298 = sbr.rel (%p296) target = $region36
        $region35: #{tpu_custom_call.1} parent=11 // pred_region
          _
        $region36: #{tpu_custom_call.1} parent=11 // pred_fallthru
          _
      $region12: #{tpu_custom_call.1} parent=5 // pred_fallthru
        _
      %p299 = scmp.lt.s32.totalorder %s21, 2
      // Predicated region
      $region37: #{tpu_custom_call.1} parent=5 // pred_check
        %p300 = pneg %p299
      $region38: #{tpu_custom_call.1} parent=5 // pred_check_branch
        %302 = sbr.rel (%p300) target = $region40
      $region39: #{tpu_custom_call.1} parent=5 // pred_region
        // Predicated region
        $region41: #{tpu_custom_call.1} parent=39 // pred_check
          %p303 = pneg %p53
        $region42: #{tpu_custom_call.1} parent=39 // pred_check_branch
          %305 = sbr.rel (%p303) target = $region44
        $region43: #{tpu_custom_call.1} parent=39 // pred_region
          %s306 = sand.u32 %s43, 1
          %s307 = scalar_lea.sflag [#allocation5], %s306
          %s308 = sand.u32 %s43, 1
          %s309 = smul.addr %s308, 8
          %s310 = scalar_lea.vmem [#allocation4], %s309
          %312 = vsyncadd %s307, 0
          %s313 = smul.addr %s28, 8
          %s314 = scalar_lea.hbm %s0, %s313
          %s316 = sshll.u32 %s314, 4
          %s317 = int_to_ptr.hbm [resolvable:$true] %s316
          %s318 = sshll.u32 %s310, 4
          %s319 = int_to_ptr.vmem [resolvable:$true] %s318
          %321 = dma.hbm_to_vmem [thread:$0]  %s317, 128, %s319, %s307
        $region44: #{tpu_custom_call.1} parent=39 // pred_fallthru
          _
      $region40: #{tpu_custom_call.1} parent=5 // pred_fallthru
        _
      %p322 = scmp.le.s32.totalorder 1, %s21
      %p323 = scmp.lt.s32.totalorder %s21, 3
      %p324 = pnand %p322, %p323
      %p325 = pneg %p324
      // Predicated region
      $region45: #{tpu_custom_call.1} parent=5 // pred_check
        _
      $region46: #{tpu_custom_call.1} parent=5 // pred_check_branch
        %327 = sbr.rel (%p324) target = $region48
      $region47: #{tpu_custom_call.1} parent=5 // pred_region
        %s328 = ssub.s32 %s21, 1
        %s329 = sand.u32 %s46, 1
        %s330 = scalar_lea.sflag [#allocation5], %s329
        %s331 = sand.u32 %s46, 1
        %s332 = smul.addr %s331, 8
        %s333 = scalar_lea.vmem [#allocation4], %s332
        // Predicated region
        $region49: #{tpu_custom_call.1} parent=47 // pred_check
          %p334 = pneg %p59
        $region50: #{tpu_custom_call.1} parent=47 // pred_check_branch
          %336 = sbr.rel (%p334) target = $region52
        $region51: #{tpu_custom_call.1} parent=47 // pred_region
          %338 = dma.done %s330, 128
        $region52: #{tpu_custom_call.1} parent=47 // pred_fallthru
          _
        // Predicated region
        $region53: #{tpu_custom_call.1} parent=47 // pred_check
          %p339 = pneg %p80
        $region54: #{tpu_custom_call.1} parent=47 // pred_check_branch
          %341 = sbr.rel (%p339) target = $region56
        $region55: #{tpu_custom_call.1} parent=47 // pred_region
          %343 = dma.done [#allocation8], 16
        $region56: #{tpu_custom_call.1} parent=47 // pred_fallthru
          _
        // Predicated region
        $region57: #{tpu_custom_call.1} parent=47 // pred_check
          %p344 = pneg %p127
        $region58: #{tpu_custom_call.1} parent=47 // pred_check_branch
          %346 = sbr.rel (%p344) target = $region60
        $region59: #{tpu_custom_call.1} parent=47 // pred_region
          %348 = dma.done [#allocation8], 2048
        $region60: #{tpu_custom_call.1} parent=47 // pred_fallthru
          _
        // Predicated region
        $region61: #{tpu_custom_call.1} parent=47 // pred_check
          %p349 = pneg %p179
        $region62: #{tpu_custom_call.1} parent=47 // pred_check_branch
          %351 = sbr.rel (%p349) target = $region64
        $region63: #{tpu_custom_call.1} parent=47 // pred_region
          %353 = dma.done [#allocation11], 2048
        $region64: #{tpu_custom_call.1} parent=47 // pred_fallthru
          _
        %s354 = sand.u32 %s46, 1
        %s355 = scalar_lea.sflag [#allocation5], %s354
        %s356 = sand.u32 %s46, 1
        %s357 = smul.addr %s356, 8
        %s358 = scalar_lea.vmem [#allocation4], %s357
        %p359 = pneg %p59
        %p360 = pneg %p56
        %p361 = pneg %p80
        %p362 = pneg %p77
        %p363 = pneg %p101
        %p364 = pneg %p98
        %p365 = pneg %p127
        %p366 = pneg %p124
        %p367 = scmp.lt.s32.totalorder %s31, 0
        %s368 = scalar_select %p367, %s31, 0
        %s369 = scalar_lea.vmem %s4, %s368
        %p370 = pneg %p153
        %p371 = pneg %p150
        %p372 = pneg %p179
        %p373 = pneg %p176
        %p374 = pneg %p200
        %p375 = pneg %p197
        %p376 = pneg %p226
        %p377 = pneg %p223
        %s378 = sand.u32 %s213, 1
        %s379 = scalar_lea.sflag [#allocation6], %s378
        %s380 = sand.u32 %s213, 1
        %s381 = smul.addr %s380, 8
        %s382 = scalar_lea.vmem [#allocation12], %s381
        %p383 = scmp.lt.s32.totalorder %s31, 0
        %s384 = scalar_select %p383, %s31, 0
        %s385 = scalar_lea.vmem %s4, %s384
        %s386 = smul.u32 16, %s31
        %p387 = scmp.eq.s32.totalorder %s31, 0
        // Predicated region
        $region65: #{tpu_custom_call.1} parent=47 // pred_check
          %p388 = pneg %p387
        $region66: #{tpu_custom_call.1} parent=47 // pred_check_branch
          %390 = sbr.rel (%p388) target = $region68
        $region67: #{tpu_custom_call.1} parent=47 // pred_region
          %v391 = vld [vmem:[%s333] sm:$0xff]
          %392 = vadd.xlane.f32.xlu0 %v391
          %v393 = vpop.xlane.xlu0 %392
          %v394 = vmul.f32 %v393, 0.03125
          %v395 = vsub.f32 %v391, %v394
          %v396 = vlaneseq
          %v397 = vand.u32 %v396, 127
          %vm398 = vcmp.lt.s32.totalorder %v397, 32
          %v399 = vsel %vm398, 1, 0
          %vm400 = vcmp.eq.s32.totalorder %v399, 1
          %v401 = vsel %vm400, %v395, 0.0
          %v402 = vmul.f32 %v401, %v401
          %403 = vadd.xlane.f32.xlu0 %v402
          %v404 = vpop.xlane.xlu0 %403
          %v405 = vmul.f32 %v404, 0.03125
          %v406 = vadd.f32 %v405, 1e-05
          %v407 = vrsqrt.pop %v406
          %v408 = vmul.f32 %v407, %v406
          %v409 = vmul.f32 %v408, %v407
          %v410 = vmul.f32 0.5, %v409
          %v411 = vsub.f32 1.5, %v410
          %v412 = vmul.f32 %v407, %v411
          %vm413 = vweird.f32 %v406
          %vm414 = vweird.f32 %v407
          %vm415 = vmor %vm413, %vm414
          %v416 = vsel %vm415, %v407, %v412
          %v417 = vmul.f32 %v401, %v416
          %v418 = vld [vmem:[#allocation7] sm:$0x1]
          %v420 = vperm.slane %v418, 0
          %v422 = vmul.f32 %v417, %v420
          %v423 = vld [vmem:[%s2] sm:$0x1]
          %v425 = vperm.slane %v423, 0
          %v427 = vadd.f32 %v422, %v425
          %428 = vst [vmem:[#allocation2] sm:$0xff] %v427
        $region68: #{tpu_custom_call.1} parent=47 // pred_fallthru
          _
        %v429 = vld [vmem:[#allocation2] sm:$0xff]
        %v430 = vld [vmem:[#allocation9] sm:$0xff]
        %v431 = vld [vmem:[#allocation9 + $0x8] sm:$0xff]
        %v432 = vld [vmem:[#allocation9 + $0x10] sm:$0xff]
        %v433 = vld [vmem:[#allocation9 + $0x18] sm:$0xff]
        %v434 = vld [vmem:[#allocation9 + $0x20] sm:$0xff]
        %v435 = vld [vmem:[#allocation9 + $0x28] sm:$0xff]
        %v436 = vld [vmem:[#allocation9 + $0x30] sm:$0xff]
        %v437 = vld [vmem:[#allocation9 + $0x38] sm:$0xff]
        %v438 = vld [vmem:[#allocation9 + $0x40] sm:$0xff]
        %v439 = vld [vmem:[#allocation9 + $0x48] sm:$0xff]
        %v440 = vld [vmem:[#allocation9 + $0x50] sm:$0xff]
        %v441 = vld [vmem:[#allocation9 + $0x58] sm:$0xff]
        %v442 = vld [vmem:[#allocation9 + $0x60] sm:$0xff]
        %v443 = vld [vmem:[#allocation9 + $0x68] sm:$0xff]
        %v444 = vld [vmem:[#allocation9 + $0x70] sm:$0xff]
        %v445 = vld [vmem:[#allocation9 + $0x78] sm:$0xff]
        %v446 = vld [vmem:[%s385] sm:$0x1]
        %v448 = vperm.slane %v446, 0
        %450 = vmatpush.msra.mxu0 %v445
        %451 = vmatpush.msra.mxu0 %v444
        %452 = vmatpush.msra.mxu0 %v443
        %453 = vmatpush.msra.mxu0 %v442
        %454 = vmatpush.msra.mxu0 %v441
        %455 = vmatpush.msra.mxu0 %v440
        %456 = vmatpush.msra.mxu0 %v439
        %457 = vmatpush.msra.mxu0 %v438
        %458 = vmatpush.msra.mxu0 %v437
        %459 = vmatpush.msra.mxu0 %v436
        %460 = vmatpush.msra.mxu0 %v435
        %461 = vmatpush.msra.mxu0 %v434
        %462 = vmatpush.msra.mxu0 %v433
        %463 = vmatpush.msra.mxu0 %v432
        %464 = vmatpush.msra.mxu0 %v431
        %465 = vmatpush.msra.mxu0 %v430
        %466 = vmatmul.f32.gmra.mxu0 %v429
        %v467 = vpop.f32.mrf.mxu0
        %v468 = vadd.f32 %v448, %v467
        %469 = vdwg.mxu0
        %v470 = vmul.f32 %v468, 0.5
        %v471 = vmul.f32 %v468, 0.70710677
        %v472 = vmul.f32 %v471, %v471
        %v473 = vmin.f32 16.0, %v472
        %v474 = vmul.f32 %v473, 2.1237322e-06
        %v475 = vadd.f32 %v474, 0.00028619796
        %v476 = vmul.f32 %v473, %v475
        %v477 = vadd.f32 %v476, 0.0036580483
        %v478 = vmul.f32 %v473, %v477
        %v479 = vadd.f32 %v478, 0.05243302
        %v480 = vmul.f32 %v473, %v479
        %v481 = vadd.f32 %v480, 0.18741608
        %v482 = vmul.f32 %v473, %v481
        %v483 = vadd.f32 %v482, 1.1283791
        %v484 = vmul.f32 %v471, %v483
        %v485 = vmul.f32 %v473, 3.8918573e-05
        %v486 = vadd.f32 %v485, 0.001143296
        %v487 = vmul.f32 %v473, %v486
        %v488 = vadd.f32 %v487, 0.014752088
        %v489 = vmul.f32 %v473, %v488
        %v490 = vadd.f32 %v489, 0.112945676
        %v491 = vmul.f32 %v473, %v490
        %v492 = vadd.f32 %v491, 0.4994258
        %v493 = vmul.f32 %v473, %v492
        %v494 = vadd.f32 %v493, 1.0
        %v495 = vrcp.pop %v494
        %v496 = vmul.f32 %v494, %v495
        %v497 = vsub.f32 1.0, %v496
        %v498 = vmul.f32 %v495, %v497
        %v499 = vadd.f32 %v495, %v498
        %vm500 = vweird.f32 %v494
        %vm501 = vweird.f32 %v495
        %vm502 = vmor %vm500, %vm501
        %v503 = vsel %vm502, %v495, %v499
        %v504 = vand.u32 2147483647, %v494
        %vm505 = vcmp.eq.f32.partialorder %v504, 8.507059e+37
        %v506 = vand.u32 %v494, 2147483648
        %v507 = vor.u32 1.1754944e-38, %v506
        %v508 = vsel %vm505, %v507, %v503
        %v509 = vmul.f32 %v484, %v508
        %v510 = vmin.f32 %v509, 1.0
        %v511 = vmax.f32 %v510, -1.0
        %v512 = vadd.f32 %v511, 1.0
        %v513 = vmul.f32 %v470, %v512
        %v514 = vld [vmem:[#allocation10] sm:$0xff]
        %v515 = vld [vmem:[#allocation10 + $0x8] sm:$0xff]
        %v516 = vld [vmem:[#allocation10 + $0x10] sm:$0xff]
        %v517 = vld [vmem:[#allocation10 + $0x18] sm:$0xff]
        %v518 = vld [vmem:[#allocation10 + $0x20] sm:$0xff]
        %v519 = vld [vmem:[#allocation10 + $0x28] sm:$0xff]
        %v520 = vld [vmem:[#allocation10 + $0x30] sm:$0xff]
        %v521 = vld [vmem:[#allocation10 + $0x38] sm:$0xff]
        %v522 = vld [vmem:[#allocation10 + $0x40] sm:$0xff]
        %v523 = vld [vmem:[#allocation10 + $0x48] sm:$0xff]
        %v524 = vld [vmem:[#allocation10 + $0x50] sm:$0xff]
        %v525 = vld [vmem:[#allocation10 + $0x58] sm:$0xff]
        %v526 = vld [vmem:[#allocation10 + $0x60] sm:$0xff]
        %v527 = vld [vmem:[#allocation10 + $0x68] sm:$0xff]
        %v528 = vld [vmem:[#allocation10 + $0x70] sm:$0xff]
        %v529 = vld [vmem:[#allocation10 + $0x78] sm:$0xff]
        %530 = vmatpush.msra.mxu0 %v529
        %531 = vmatpush.msra.mxu0 %v528
        %532 = vmatpush.msra.mxu0 %v527
        %533 = vmatpush.msra.mxu0 %v526
        %534 = vmatpush.msra.mxu0 %v525
        %535 = vmatpush.msra.mxu0 %v524
        %536 = vmatpush.msra.mxu0 %v523
        %537 = vmatpush.msra.mxu0 %v522
        %538 = vmatpush.msra.mxu0 %v521
        %539 = vmatpush.msra.mxu0 %v520
        %540 = vmatpush.msra.mxu0 %v519
        %541 = vmatpush.msra.mxu0 %v518
        %542 = vmatpush.msra.mxu0 %v517
        %543 = vmatpush.msra.mxu0 %v516
        %544 = vmatpush.msra.mxu0 %v515
        %545 = vmatpush.msra.mxu0 %v514
        %546 = vmatmul.f32.gmra.mxu0 %v513
        %v547 = vpop.f32.mrf.mxu0
        %v548 = vadd.f32 0.0, %v547
        %549 = vdwg.mxu0
        // Predicated region
        $region69: #{tpu_custom_call.1} parent=47 // pred_check
          %p550 = pneg %p387
        $region70: #{tpu_custom_call.1} parent=47 // pred_check_branch
          %552 = sbr.rel (%p550) target = $region72
        $region71: #{tpu_custom_call.1} parent=47 // pred_region
          %553 = vst [vmem:[#allocation3] sm:$0xff] %v548
        $region72: #{tpu_custom_call.1} parent=47 // pred_fallthru
          _
        %p554 = scmp.gt.s32.totalorder %s31, 0
        // Predicated region
        $region73: #{tpu_custom_call.1} parent=47 // pred_check
          %p555 = pneg %p554
        $region74: #{tpu_custom_call.1} parent=47 // pred_check_branch
          %557 = sbr.rel (%p555) target = $region76
        $region75: #{tpu_custom_call.1} parent=47 // pred_region
          %v558 = vld [vmem:[#allocation3] sm:$0xff]
          %v559 = vadd.f32 %v558, %v548
          %560 = vst [vmem:[#allocation3] sm:$0xff] %v559
        $region76: #{tpu_custom_call.1} parent=47 // pred_fallthru
          _
        // Predicated region
        $region77: #{tpu_custom_call.1} parent=47 // pred_check
          %p561 = pneg %p387
        $region78: #{tpu_custom_call.1} parent=47 // pred_check_branch
          %563 = sbr.rel (%p561) target = $region80
        $region79: #{tpu_custom_call.1} parent=47 // pred_region
          %v564 = vld [vmem:[#allocation3] sm:$0xff]
          %v565 = vld [vmem:[%s6] sm:$0x1]
          %v567 = vperm.slane %v565, 0
          %v569 = vadd.f32 %v564, %v567
          %v570 = vld [vmem:[%s333] sm:$0xff]
          %v571 = vadd.f32 %v569, %v570
          %572 = vst [vmem:[%s382] sm:$0xff] %v571
        $region80: #{tpu_custom_call.1} parent=47 // pred_fallthru
          _
        %s573 = sand.u32 %s213, 1
        %s574 = scalar_lea.sflag [#allocation6], %s573
        %s575 = sand.u32 %s213, 1
        %s576 = smul.addr %s575, 8
        %s577 = scalar_lea.vmem [#allocation12], %s576
        // Predicated region
        $region81: #{tpu_custom_call.1} parent=47 // pred_check
          %p578 = pneg %p223
        $region82: #{tpu_custom_call.1} parent=47 // pred_check_branch
          %580 = sbr.rel (%p578) target = $region84
        $region83: #{tpu_custom_call.1} parent=47 // pred_region
          %582 = vsyncadd %s574, 0
          %s583 = smul.addr %s30, 8
          %s584 = scalar_lea.hbm %s7, %s583
          %s586 = sshll.u32 %s577, 4
          %s587 = int_to_ptr.vmem [resolvable:$true] %s586
          %s588 = sshll.u32 %s584, 4
          %s589 = int_to_ptr.hbm [resolvable:$true] %s588
          %591 = dma.vmem_to_hbm [thread:$0]  %s587, 128, %s589, %s574
        $region84: #{tpu_custom_call.1} parent=47 // pred_fallthru
          _
      $region48: #{tpu_custom_call.1} parent=5 // pred_fallthru
        _
      %p592 = scmp.le.s32.totalorder 2, %s21
      // Predicated region
      $region85: #{tpu_custom_call.1} parent=5 // pred_check
        %p593 = pneg %p592
      $region86: #{tpu_custom_call.1} parent=5 // pred_check_branch
        %595 = sbr.rel (%p593) target = $region88
      $region87: #{tpu_custom_call.1} parent=5 // pred_region
        %s596 = ssub.s32 %s21, 2
        // Predicated region
        $region89: #{tpu_custom_call.1} parent=87 // pred_check
          %p597 = pneg %p229
        $region90: #{tpu_custom_call.1} parent=87 // pred_check_branch
          %599 = sbr.rel (%p597) target = $region92
        $region91: #{tpu_custom_call.1} parent=87 // pred_region
          %s600 = sand.u32 %s214, 1
          %s601 = scalar_lea.sflag [#allocation6], %s600
          %s602 = sand.u32 %s214, 1
          %s603 = smul.addr %s602, 8
          %s604 = scalar_lea.vmem [#allocation12], %s603
          %606 = dma.done %s601, 128
        $region92: #{tpu_custom_call.1} parent=87 // pred_fallthru
          _
      $region88: #{tpu_custom_call.1} parent=5 // pred_fallthru
        _
    $region6: #{tpu_custom_call.1} parent=1 // loop_footer
      %s25 = sadd.s32 1, %s21
    $region7: #{tpu_custom_call.1} parent=1 // loop_footer_branch
      %20 = sbr.rel target = $region3
    $region8: #{tpu_custom_call.1} parent=1 // loop_exit
      _
    %607 = vsyncpa [#allocation5], 1
    %s608 = scalar_lea.sflag [#allocation5], 1
    %609 = vsyncpa %s608, 1
    %610 = vsyncpa [#allocation8], 1
    %611 = vsyncpa [#allocation11], 1
    %612 = vsyncpa [#allocation6], 1
    %s613 = scalar_lea.sflag [#allocation6], 1
    %614 = vsyncpa %s613, 1

</llo_original>
